<compile_context>
chip_gen: v6e
topology: v6e:2x2x1
jax: 0.10.0
libtpu: 0.0.40
codegen_flags: <defaults>
</compile_context>

<pallas_src>
import functools

import jax
import jax.numpy as jnp
from jax.experimental import pallas as pl
from jax.experimental.pallas import tpu as pltpu

HIDDEN = 128
_TB_CAP = 1024  # large-batch tile size (per perf review: 1024-2048)


def _round_up(v, m):
    return ((v + m - 1) // m) * m


def _tpu_core_info():
    """Best-effort (num_tensorcores, is_v5e). Falls back to (1, False)."""
    kind = ""
    try:
        kind = jax.devices()[0].device_kind.lower()
    except Exception:
        pass
    is_v5e = ("v5e" in kind) or ("v5" in kind and "lite" in kind)

    num_cores = 0
    try:
        info = pltpu.get_tpu_info()
        for attr in ("num_cores", "core_count", "num_tensorcores",
                     "tensorcore_count"):
            v = getattr(info, attr, None)
            if isinstance(v, int) and v > 0:
                num_cores = v
                break
    except Exception:
        pass
    if num_cores <= 0:
        # Heuristic fallback: dual-TC / megacore generations.
        if ("v7" in kind) or ("v4" in kind) or ("v5p" in kind) or (
                "v5" in kind and "lite" not in kind and "v5e" not in kind):
            num_cores = 2
        else:
            num_cores = 1
    return num_cores, is_v5e


_NUM_TC, _IS_V5E = _tpu_core_info()


# ---------------------------------------------------------------------------
# Kernel
# ---------------------------------------------------------------------------
def _model_kernel(x_ref, w1_ref, w2_ref, w3_ref, w4_ref, b_ref, out_ref,
                  *, hidden, head_pad, split_stage2):
    H = hidden
    f32 = jnp.float32
    bf16 = jnp.bfloat16

    def mm(h, w):
        # bf16 x bf16 on the MXU, f32 accumulation.
        return jnp.dot(h.astype(bf16), w, preferred_element_type=f32)

    # Packed biases + beta-lane mask (static lane slices at 128-multiples).
    b1 = b_ref[:, 0:2 * H]
    b2 = b_ref[:, 2 * H:4 * H]
    b3 = b_ref[:, 4 * H:6 * H]
    b4 = b_ref[:, 6 * H:6 * H + head_pad]
    beta_mask = b_ref[:, 6 * H + head_pad:]

    x = x_ref[...]                                        # bf16 [TB, S]

    # Stage 1: fused first layers of actor_body & value_layer_options.
    h1 = jnp.maximum(mm(x, w1_ref[...]) + b1, 0.0)        # [TB, 2H] = [actor1 | hv1]

    # Stage 2: block-diagonal fused second layers.
    if split_stage2:
        # v5e: 128x128 MXU -> skip the all-zero off-diagonal weight tiles.
        actor = jnp.maximum(mm(h1[:, :H], w2_ref[:H, :H]) + b2[:, :H], 0.0)
        hv2 = jnp.maximum(mm(h1[:, H:], w2_ref[H:, H:]) + b2[:, H:], 0.0)
    else:
        h2 = jnp.maximum(mm(h1, w2_ref[...]) + b2, 0.0)   # [TB, 2H] = [actor | hv2]
        actor = h2[:, :H]
        hv2 = h2[:, H:]

    # Stage 3: fused first layers of action_layer & beta_layer.
    h3 = jnp.maximum(mm(actor, w3_ref[...]) + b3, 0.0)    # [TB, 2H] = [h_a | h_b]

    # Stage 4: block-diagonal fused heads as two dot-accumulates into one
    # lane-dense [TB, head_pad] slab (no concat intermediate).
    raw = mm(h3, w4_ref[:2 * H, :]) + mm(hv2, w4_ref[2 * H:, :]) + b4

    # Sigmoid only on the beta lanes (logits/values stay raw).
    out = jnp.where(beta_mask > 0.5, jax.nn.sigmoid(raw), raw)
    out_ref[...] = out.astype(out_ref.dtype)


# ---------------------------------------------------------------------------
# Params: PyTorch-Linear-style init (weights stored as [in, out]: y = x @ W + b)
# ---------------------------------------------------------------------------
def init_params(key, state_dim, action_dim, option_dim, hidden_size=HIDDEN):
    dims = [
        ("ab1", state_dim, hidden_size),
        ("ab2", hidden_size, hidden_size),
        ("al1", hidden_size, hidden_size),
        ("al2", hidden_size, action_dim * option_dim),
        ("bl1", hidden_size, hidden_size),
        ("bl2", hidden_size, option_dim),
        ("vl1", state_dim, hidden_size),
        ("vl2", hidden_size, hidden_size),
        ("vl3", hidden_size, option_dim),
    ]
    params = {}
    for name, fan_in, fan_out in dims:
        key, kw, kb = jax.random.split(key, 3)
        bound = 1.0 / jnp.sqrt(jnp.float32(fan_in))
        params["w_" + name] = jax.random.uniform(
            kw, (fan_in, fan_out), jnp.float32, -bound, bound)
        params["b_" + name] = jax.random.uniform(
            kb, (1, fan_out), jnp.float32, -bound, bound)
    return params


def pack_params(p, state_dim, action_dim, option_dim, hidden_size=HIDDEN):
    """One-time packing: branch fusion, head padding to 128 lanes, bf16 weights."""
    H = hidden_size
    n_log, n_b, n_v = action_dim * option_dim, option_dim, option_dim
    head_w = n_log + n_b + n_v
    head_pad = max(128, _round_up(head_w, 128))

    # Stage 1: shared-input fusion (x).
    w1 = jnp.concatenate([p["w_ab1"], p["w_vl1"]], axis=1)            # [S, 2H]
    b1 = jnp.concatenate([p["b_ab1"], p["b_vl1"]], axis=1)            # [1, 2H]
    # Stage 2: block diagonal (actor1 -> actor, hv1 -> hv2).
    w2 = jnp.zeros((2 * H, 2 * H), jnp.float32)
    w2 = w2.at[:H, :H].set(p["w_ab2"]).at[H:, H:].set(p["w_vl2"])
    b2 = jnp.concatenate([p["b_ab2"], p["b_vl2"]], axis=1)
    # Stage 3: shared-input fusion (actor).
    w3 = jnp.concatenate([p["w_al1"], p["w_bl1"]], axis=1)            # [H, 2H]
    b3 = jnp.concatenate([p["b_al1"], p["b_bl1"]], axis=1)
    # Stage 4: block-diagonal heads, padded to a lane-dense 128-wide output.
    w4 = jnp.zeros((3 * H, head_pad), jnp.float32)
    w4 = w4.at[:H, 0:n_log].set(p["w_al2"])
    w4 = w4.at[H:2 * H, n_log:n_log + n_b].set(p["w_bl2"])
    w4 = w4.at[2 * H:, n_log + n_b:n_log + n_b + n_v].set(p["w_vl3"])
    b4 = jnp.zeros((1, head_pad), jnp.float32)
    b4 = b4.at[:, 0:n_log].set(p["b_al2"])
    b4 = b4.at[:, n_log:n_log + n_b].set(p["b_bl2"])
    b4 = b4.at[:, n_log + n_b:n_log + n_b + n_v].set(p["b_vl3"])
    # Precomputed beta-lane select mask, packed next to the biases.
    mask = jnp.zeros((1, head_pad), jnp.float32)
    mask = mask.at[:, n_log:n_log + n_b].set(1.0)

    b_all = jnp.concatenate([b1, b2, b3, b4, mask], axis=1)  # [1, 6H + 2*head_pad]

    return {
        "w1": w1.astype(jnp.bfloat16),
        "w2": w2.astype(jnp.bfloat16),
        "w3": w3.astype(jnp.bfloat16),
        "w4": w4.astype(jnp.bfloat16),
        "b_all": b_all.astype(jnp.float32),
    }


# ---------------------------------------------------------------------------
# Forward
# ---------------------------------------------------------------------------
@functools.partial(jax.jit,
                   static_argnames=("action_dim", "option_dim", "hidden_size"))
def model_forward(x, packed, *, action_dim, option_dim, hidden_size=HIDDEN):
    batch, state_dim = x.shape
    H = hidden_size
    n_log = action_dim * option_dim
    head_pad = packed["w4"].shape[1]
    b_width = packed["b_all"].shape[1]

    # Cast the input once (halves input DMA; MXU consumes bf16 anyway).
    x_bf = x.astype(jnp.bfloat16)

    # Batch tiling:
    #  * small batch -> single tile rounded to 16 rows (full bf16 sublane pack)
    #  * dual-TC chips (v7x / megacore) -> at least 2 parallel grid steps
    #  * large batch -> 1024-row tiles (per-step overhead amortized)
    min_tiles = 2 if (_NUM_TC > 1 and batch >= 32) else 1
    tb = min(_TB_CAP, _round_up(-(-batch // min_tiles), 16))
    pb = _round_up(batch, tb)
    if pb != batch:
        x_bf = jnp.pad(x_bf, ((0, pb - batch), (0, 0)))
    grid = (pb // tb,)

    kernel = functools.partial(
        _model_kernel, hidden=H, head_pad=head_pad, split_stage2=_IS_V5E)

    out = pl.pallas_call(
        kernel,
        out_shape=jax.ShapeDtypeStruct((pb, head_pad), jnp.bfloat16),
        grid=grid,
        in_specs=[
            pl.BlockSpec((tb, state_dim), lambda i: (i, 0)),       # x: tiled over batch
            pl.BlockSpec(packed["w1"].shape, lambda i: (0, 0)),    # weights: VMEM-resident
            pl.BlockSpec(packed["w2"].shape, lambda i: (0, 0)),
            pl.BlockSpec(packed["w3"].shape, lambda i: (0, 0)),
            pl.BlockSpec(packed["w4"].shape, lambda i: (0, 0)),
            pl.BlockSpec((1, b_width), lambda i: (0, 0)),          # biases + beta mask
        ],
        out_specs=pl.BlockSpec((tb, head_pad), lambda i: (i, 0)),  # lane-dense bf16 slab
        compiler_params=pltpu.CompilerParams(
            dimension_semantics=("parallel",)),
    )(x_bf, packed["w1"], packed["w2"], packed["w3"], packed["w4"],
      packed["b_all"])

    out = out[:batch].astype(jnp.float32)
    policy_logits = out[:, :n_log].reshape(batch, option_dim, action_dim)
    betas = out[:, n_log:n_log + option_dim]
    values = out[:, n_log + option_dim:n_log + 2 * option_dim]
    return policy_logits, betas, values


# Pure-JAX f32 reference (mirrors the PyTorch forward) for a sanity check.
def _reference_forward(x, p, action_dim, option_dim):
    relu = lambda h: jnp.maximum(h, 0.0)
    lin = lambda h, n: h @ p["w_" + n] + p["b_" + n]
    actor = relu(lin(relu(lin(x, "ab1")), "ab2"))
    logits = lin(relu(lin(actor, "al1")), "al2").reshape(-1, option_dim, action_dim)
    betas = jax.nn.sigmoid(lin(relu(lin(actor, "bl1")), "bl2"))
    values = lin(relu(lin(relu(lin(x, "vl1")), "vl2")), "vl3")
    return logits, betas, values


if __name__ == "__main__":
    state_dim = 32
    action_dim = 6
    option_dim = 4
    hidden_size = HIDDEN

    key = jax.random.PRNGKey(0)
    key, kp = jax.random.split(key)
    params = init_params(kp, state_dim, action_dim, option_dim, hidden_size)
    packed = pack_params(params, state_dim, action_dim, option_dim, hidden_size)

    ok = True
    for batch in (8, 48):   # small single-tile path + multi-tile path
        key, kx = jax.random.split(key)
        x = jax.random.normal(kx, (batch, state_dim), jnp.float32)

        policy_logits, betas, values = model_forward(
            x, packed, action_dim=action_dim, option_dim=option_dim,
            hidden_size=hidden_size)
        jax.block_until_ready((policy_logits, betas, values))

        assert policy_logits.shape == (batch, option_dim, action_dim)
        assert betas.shape == (batch, option_dim)
        assert values.shape == (batch, option_dim)

        # Loose tolerance: bf16 weights/activations on the MXU + bf16 output slab.
        rl, rb, rv = _reference_forward(x, params, action_dim, option_dim)
        ok &= float(jnp.max(jnp.abs(policy_logits - rl))) < 0.15
        ok &= float(jnp.max(jnp.abs(betas - rb))) < 0.15
        ok &= float(jnp.max(jnp.abs(values - rv))) < 0.15

    assert ok
    print("KERNEL_OK")
</pallas_src>

<mosaic_0001>
module attributes {stable_mosaic.version = 11 : i64} {
  func.func @_model_kernel(%arg0: i32, %arg1: memref<16x32xbf16, #tpu.memory_space<vmem>>, %arg2: memref<32x256xbf16, #tpu.memory_space<vmem>>, %arg3: memref<256x256xbf16, #tpu.memory_space<vmem>>, %arg4: memref<128x256xbf16, #tpu.memory_space<vmem>>, %arg5: memref<384x128xbf16, #tpu.memory_space<vmem>>, %arg6: memref<1x1024xf32, #tpu.memory_space<vmem>>, %arg7: memref<16x128xbf16, #tpu.memory_space<vmem>>) attributes {dimension_semantics = [#tpu.dimension_semantics<parallel>], iteration_bounds = array<i64: 1>, scalar_prefetch = 0 : i64, scratch_operands = 0 : i64, tpu.core_type = #tpu.core_type<tc>, window_params = [{transform_indices = @transform_0, window_bounds = array<i64: 16, 32>}, {pipeline_mode = #tpu.pipeline_mode<synchronous>, transform_indices = @transform_1, window_bounds = array<i64: 32, 256>}, {pipeline_mode = #tpu.pipeline_mode<synchronous>, transform_indices = @transform_2, window_bounds = array<i64: 256, 256>}, {pipeline_mode = #tpu.pipeline_mode<synchronous>, transform_indices = @transform_3, window_bounds = array<i64: 128, 256>}, {pipeline_mode = #tpu.pipeline_mode<synchronous>, transform_indices = @transform_4, window_bounds = array<i64: 384, 128>}, {pipeline_mode = #tpu.pipeline_mode<synchronous>, transform_indices = @transform_5, window_bounds = array<i64: 1, 1024>}, {transform_indices = @transform_6, window_bounds = array<i64: 16, 128>}]} {
    %c0 = arith.constant 0 : index
    %c0_0 = arith.constant 0 : index
    %0 = vector.load %arg6[%c0, %c0_0] : memref<1x1024xf32, #tpu.memory_space<vmem>>, vector<1x256xf32>
    %c0_1 = arith.constant 0 : index
    %c256 = arith.constant 256 : index
    %1 = vector.load %arg6[%c0_1, %c256] : memref<1x1024xf32, #tpu.memory_space<vmem>>, vector<1x256xf32>
    %c0_2 = arith.constant 0 : index
    %c512 = arith.constant 512 : index
    %2 = vector.load %arg6[%c0_2, %c512] : memref<1x1024xf32, #tpu.memory_space<vmem>>, vector<1x256xf32>
    %c0_3 = arith.constant 0 : index
    %c768 = arith.constant 768 : index
    %3 = vector.load %arg6[%c0_3, %c768] : memref<1x1024xf32, #tpu.memory_space<vmem>>, vector<1x128xf32>
    %c0_4 = arith.constant 0 : index
    %c896 = arith.constant 896 : index
    %4 = vector.load %arg6[%c0_4, %c896] : memref<1x1024xf32, #tpu.memory_space<vmem>>, vector<1x128xf32>
    %c0_5 = arith.constant 0 : index
    %c0_6 = arith.constant 0 : index
    %5 = vector.load %arg1[%c0_5, %c0_6] : memref<16x32xbf16, #tpu.memory_space<vmem>>, vector<16x32xbf16>
    %c0_7 = arith.constant 0 : index
    %c0_8 = arith.constant 0 : index
    %6 = vector.load %arg2[%c0_7, %c0_8] : memref<32x256xbf16, #tpu.memory_space<vmem>>, vector<32x256xbf16>
    %cst = arith.constant dense<0.000000e+00> : vector<16x256xf32>
    %7 = tpu.matmul %5, %6, %cst {dimension_numbers = #tpu.dot_dimension_numbers<[1], [0], [0], [1], [0, 0, 1, 1], [], []>} : vector<16x32xbf16>, vector<32x256xbf16>, vector<16x256xf32> -> vector<16x256xf32>
    %8 = vector.broadcast %0 : vector<1x256xf32> to vector<16x256xf32>
    %9 = arith.addf %7, %8 : vector<16x256xf32>
    %cst_9 = arith.constant 0.000000e+00 : f32
    %10 = vector.broadcast %cst_9 : f32 to vector<16x256xf32>
    %11 = arith.maximumf %9, %10 : vector<16x256xf32>
    %c0_10 = arith.constant 0 : index
    %c0_11 = arith.constant 0 : index
    %12 = vector.load %arg3[%c0_10, %c0_11] : memref<256x256xbf16, #tpu.memory_space<vmem>>, vector<256x256xbf16>
    %13 = arith.truncf %11 : vector<16x256xf32> to vector<16x256xbf16>
    %cst_12 = arith.constant dense<0.000000e+00> : vector<16x256xf32>
    %14 = tpu.matmul %13, %12, %cst_12 {dimension_numbers = #tpu.dot_dimension_numbers<[1], [0], [0], [1], [0, 0, 1, 1], [], []>} : vector<16x256xbf16>, vector<256x256xbf16>, vector<16x256xf32> -> vector<16x256xf32>
    %15 = vector.broadcast %1 : vector<1x256xf32> to vector<16x256xf32>
    %16 = arith.addf %14, %15 : vector<16x256xf32>
    %cst_13 = arith.constant 0.000000e+00 : f32
    %17 = vector.broadcast %cst_13 : f32 to vector<16x256xf32>
    %18 = arith.maximumf %16, %17 : vector<16x256xf32>
    %19 = vector.extract_strided_slice %18 {offsets = [0, 0], sizes = [16, 128], strides = [1, 1]} : vector<16x256xf32> to vector<16x128xf32>
    %20 = vector.extract_strided_slice %18 {offsets = [0, 128], sizes = [16, 128], strides = [1, 1]} : vector<16x256xf32> to vector<16x128xf32>
    %c0_14 = arith.constant 0 : index
    %c0_15 = arith.constant 0 : index
    %21 = vector.load %arg4[%c0_14, %c0_15] : memref<128x256xbf16, #tpu.memory_space<vmem>>, vector<128x256xbf16>
    %22 = arith.truncf %19 : vector<16x128xf32> to vector<16x128xbf16>
    %cst_16 = arith.constant dense<0.000000e+00> : vector<16x256xf32>
    %23 = tpu.matmul %22, %21, %cst_16 {dimension_numbers = #tpu.dot_dimension_numbers<[1], [0], [0], [1], [0, 0, 1, 1], [], []>} : vector<16x128xbf16>, vector<128x256xbf16>, vector<16x256xf32> -> vector<16x256xf32>
    %24 = vector.broadcast %2 : vector<1x256xf32> to vector<16x256xf32>
    %25 = arith.addf %23, %24 : vector<16x256xf32>
    %cst_17 = arith.constant 0.000000e+00 : f32
    %26 = vector.broadcast %cst_17 : f32 to vector<16x256xf32>
    %27 = arith.maximumf %25, %26 : vector<16x256xf32>
    %c0_18 = arith.constant 0 : index
    %c0_19 = arith.constant 0 : index
    %28 = vector.load %arg5[%c0_18, %c0_19] : memref<384x128xbf16, #tpu.memory_space<vmem>>, vector<256x128xbf16>
    %29 = arith.truncf %27 : vector<16x256xf32> to vector<16x256xbf16>
    %cst_20 = arith.constant dense<0.000000e+00> : vector<16x128xf32>
    %30 = tpu.matmul %29, %28, %cst_20 {dimension_numbers = #tpu.dot_dimension_numbers<[1], [0], [0], [1], [0, 0, 1, 1], [], []>} : vector<16x256xbf16>, vector<256x128xbf16>, vector<16x128xf32> -> vector<16x128xf32>
    %c256_21 = arith.constant 256 : index
    %c0_22 = arith.constant 0 : index
    %31 = vector.load %arg5[%c256_21, %c0_22] : memref<384x128xbf16, #tpu.memory_space<vmem>>, vector<128x128xbf16>
    %32 = arith.truncf %20 : vector<16x128xf32> to vector<16x128xbf16>
    %cst_23 = arith.constant dense<0.000000e+00> : vector<16x128xf32>
    %33 = tpu.matmul %32, %31, %cst_23 {dimension_numbers = #tpu.dot_dimension_numbers<[1], [0], [0], [1], [0, 0, 1, 1], [], []>} : vector<16x128xbf16>, vector<128x128xbf16>, vector<16x128xf32> -> vector<16x128xf32>
    %34 = arith.addf %30, %33 : vector<16x128xf32>
    %35 = vector.broadcast %3 : vector<1x128xf32> to vector<16x128xf32>
    %36 = arith.addf %34, %35 : vector<16x128xf32>
    %cst_24 = arith.constant 5.000000e-01 : f32
    %37 = vector.broadcast %cst_24 : f32 to vector<1x128xf32>
    %38 = arith.cmpf ogt, %4, %37 : vector<1x128xf32>
    %39 = arith.negf %36 : vector<16x128xf32>
    %40 = math.exp %39 : vector<16x128xf32>
    %cst_25 = arith.constant 1.000000e+00 : f32
    %41 = vector.broadcast %cst_25 : f32 to vector<16x128xf32>
    %42 = arith.addf %41, %40 : vector<16x128xf32>
    %43 = arith.divf %41, %42 : vector<16x128xf32>
    %44 = vector.shape_cast %38 : vector<1x128xi1> to vector<1x128xi1>
    %45 = vector.broadcast %44 : vector<1x128xi1> to vector<16x128xi1>
    %46 = arith.select %45, %43, %36 : vector<16x128xi1>, vector<16x128xf32>
    %47 = arith.truncf %46 : vector<16x128xf32> to vector<16x128xbf16>
    %c0_26 = arith.constant 0 : index
    %c0_27 = arith.constant 0 : index
    %48 = vector.load %arg7[%c0_26, %c0_27] : memref<16x128xbf16, #tpu.memory_space<vmem>>, vector<16x128xbf16>
    tpu.vector_store %arg7[%c0_26, %c0_27], %47 {strides = array<i32>} : memref<16x128xbf16, #tpu.memory_space<vmem>>, vector<16x128xbf16>,
    return
  }
  func.func @transform_0(%arg0: i32) -> (i32, i32) {
    %c0_i32 = arith.constant 0 : i32
    %c0_i32_0 = arith.constant 0 : i32
    return %arg0, %c0_i32 : i32, i32
  }
  func.func @transform_1(%arg0: i32) -> (i32, i32) {
    %c0_i32 = arith.constant 0 : i32
    %c0_i32_0 = arith.constant 0 : i32
    %c0_i32_1 = arith.constant 0 : i32
    return %c0_i32, %c0_i32_0 : i32, i32
  }
  func.func @transform_2(%arg0: i32) -> (i32, i32) {
    %c0_i32 = arith.constant 0 : i32
    %c0_i32_0 = arith.constant 0 : i32
    %c0_i32_1 = arith.constant 0 : i32
    return %c0_i32, %c0_i32_0 : i32, i32
  }
  func.func @transform_3(%arg0: i32) -> (i32, i32) {
    %c0_i32 = arith.constant 0 : i32
    %c0_i32_0 = arith.constant 0 : i32
    %c0_i32_1 = arith.constant 0 : i32
    return %c0_i32, %c0_i32_0 : i32, i32
  }
  func.func @transform_4(%arg0: i32) -> (i32, i32) {
    %c0_i32 = arith.constant 0 : i32
    %c0_i32_0 = arith.constant 0 : i32
    %c0_i32_1 = arith.constant 0 : i32
    return %c0_i32, %c0_i32_0 : i32, i32
  }
  func.func @transform_5(%arg0: i32) -> (i32, i32) {
    %c0_i32 = arith.constant 0 : i32
    %c0_i32_0 = arith.constant 0 : i32
    %c0_i32_1 = arith.constant 0 : i32
    return %c0_i32, %c0_i32_0 : i32, i32
  }
  func.func @transform_6(%arg0: i32) -> (i32, i32) {
    %c0_i32 = arith.constant 0 : i32
    %c0_i32_0 = arith.constant 0 : i32
    return %arg0, %c0_i32 : i32, i32
  }
}

</mosaic_0001>

<llo_original>
// kernel: model_forward.1
$region0: #{model_forward.1}
  #allocation0 [shape = 'u32[]', space=smem, size = 0x4, offset = 0x4, fixed_abs, tag = 'smem constant byte address 0x4 - core index']
  #allocation1 [shape = 'u32[144,128]{1,0:T(1,128)}', space=vmem, size = 0x12000, scoped, tag = 'internal scratch']
  %s0 = inlined_call_operand.vmem [shape: bf16[16,32], index: 0, kind: input, shape index: {}]
  %s1 = inlined_call_operand.hbm [shape: bf16[32,256], index: 1, kind: input, shape index: {}]
  %s2 = inlined_call_operand.hbm [shape: bf16[256,256], index: 2, kind: input, shape index: {}]
  %s3 = inlined_call_operand.hbm [shape: bf16[128,256], index: 3, kind: input, shape index: {}]
  %s4 = inlined_call_operand.hbm [shape: bf16[384,128], index: 4, kind: input, shape index: {}]
  %s5 = inlined_call_operand.vmem [shape: f32[1,1024], index: 5, kind: input, shape index: {}]
  %s6 = inlined_call_operand.vmem [shape: bf16[16,128], index: 6, kind: output, shape index: {}]
  %s7 = sld [smem:[#allocation0]]
  $region50: #{model_forward.1} parent=0
    _
  %s9 = ssub.s32 1, %s7
  %s10 = scalar_select 0, %s9, %s7
  $region1: #{model_forward.1} parent=0
    #allocation2 [shape = 'u8[16384]{0}', space=vmem, size = 0x4000, scoped, tag = 'input window, operand 1, single buffered']
    #allocation3 [shape = 's32[1]{0}', space=sflag, size = 0x4, scoped, tag = 'scoped memory for model_forward.1']
    #allocation4 [shape = 'u8[131072]{0}', space=vmem, size = 0x20000, scoped, tag = 'input window, operand 2, single buffered']
    #allocation5 [shape = 's32[1]{0}', space=sflag, size = 0x4, scoped, tag = 'scoped memory for model_forward.1']
    #allocation6 [shape = 'u8[65536]{0}', space=vmem, size = 0x10000, scoped, tag = 'input window, operand 3, single buffered']
    #allocation7 [shape = 'u8[98304]{0}', space=vmem, size = 0x18000, scoped, tag = 'input window, operand 4, single buffered']
    #allocation8 [shape = 's32[1]{0}', space=sflag, size = 0x4, scoped, tag = 'scoped memory for model_forward.1']
    %11 = vsyncpa [#allocation3], 0
    %12 = vsyncpa [#allocation5], 0
    %13 = vsyncpa [#allocation8], 0
    // Predicated region
    $region2: #{model_forward.1} parent=1 // pred_check
      _
    $region3: #{model_forward.1} parent=1 // pred_check_branch
      %15 = sbr.rel (0) target = $region5
    $region4: #{model_forward.1} parent=1 // pred_region
      _
    $region5: #{model_forward.1} parent=1 // pred_fallthru
      _
    // Predicated region
    $region6: #{model_forward.1} parent=1 // pred_check
      _
    $region7: #{model_forward.1} parent=1 // pred_check_branch
      %17 = sbr.rel (0) target = $region9
    $region8: #{model_forward.1} parent=1 // pred_region
      %s19 = ssub.s32 512, 512
      %20 = vsyncadd [#allocation3], %s19
      %s21 = sshll.u32 [#allocation2], 4
      %s22 = int_to_ptr.vmem [resolvable:$true] %s21
      %27 = dma.hbm_to_vmem [thread:$0]  %s1, 512, %s22, [#allocation3], 128, 128, 8
    $region9: #{model_forward.1} parent=1 // pred_fallthru
      _
    // Predicated region
    $region10: #{model_forward.1} parent=1 // pred_check
      _
    $region11: #{model_forward.1} parent=1 // pred_check_branch
      %29 = sbr.rel (0) target = $region13
    $region12: #{model_forward.1} parent=1 // pred_region
      %s31 = ssub.s32 4096, 4096
      %32 = vsyncadd [#allocation5], %s31
      %s33 = sshll.u32 [#allocation4], 4
      %s34 = int_to_ptr.vmem [resolvable:$true] %s33
      %39 = dma.hbm_to_vmem [thread:$0]  %s2, 4096, %s34, [#allocation5], 128, 128, 8
    $region13: #{model_forward.1} parent=1 // pred_fallthru
      _
    // Predicated region
    $region14: #{model_forward.1} parent=1 // pred_check
      _
    $region15: #{model_forward.1} parent=1 // pred_check_branch
      %41 = sbr.rel (0) target = $region17
    $region16: #{model_forward.1} parent=1 // pred_region
      %s43 = ssub.s32 2048, 2048
      %44 = vsyncadd [#allocation5], %s43
      %s45 = sshll.u32 [#allocation6], 4
      %s46 = int_to_ptr.vmem [resolvable:$true] %s45
      %51 = dma.hbm_to_vmem [thread:$0]  %s3, 2048, %s46, [#allocation5], 128, 128, 8
    $region17: #{model_forward.1} parent=1 // pred_fallthru
      _
    // Predicated region
    $region18: #{model_forward.1} parent=1 // pred_check
      _
    $region19: #{model_forward.1} parent=1 // pred_check_branch
      %53 = sbr.rel (0) target = $region21
    $region20: #{model_forward.1} parent=1 // pred_region
      %s55 = ssub.s32 3072, 3072
      %56 = vsyncadd [#allocation8], %s55
      %s57 = sshll.u32 [#allocation7], 4
      %s58 = int_to_ptr.vmem [resolvable:$true] %s57
      %63 = dma.hbm_to_vmem [thread:$0]  %s4, 3072, %s58, [#allocation8], 64, 64, 4
    $region21: #{model_forward.1} parent=1 // pred_fallthru
      _
    // Predicated region
    $region22: #{model_forward.1} parent=1 // pred_check
      _
    $region23: #{model_forward.1} parent=1 // pred_check_branch
      %65 = sbr.rel (0) target = $region25
    $region24: #{model_forward.1} parent=1 // pred_region
      _
    $region25: #{model_forward.1} parent=1 // pred_fallthru
      _
    // Predicated region
    $region26: #{model_forward.1} parent=1 // pred_check
      _
    $region27: #{model_forward.1} parent=1 // pred_check_branch
      %67 = sbr.rel (0) target = $region29
    $region28: #{model_forward.1} parent=1 // pred_region
      %68 = dma.done [#allocation3], 512
    $region29: #{model_forward.1} parent=1 // pred_fallthru
      _
    // Predicated region
    $region30: #{model_forward.1} parent=1 // pred_check
      _
    $region31: #{model_forward.1} parent=1 // pred_check_branch
      %70 = sbr.rel (0) target = $region33
    $region32: #{model_forward.1} parent=1 // pred_region
      %71 = dma.done [#allocation5], 4096
    $region33: #{model_forward.1} parent=1 // pred_fallthru
      _
    // Predicated region
    $region34: #{model_forward.1} parent=1 // pred_check
      _
    $region35: #{model_forward.1} parent=1 // pred_check_branch
      %73 = sbr.rel (0) target = $region37
    $region36: #{model_forward.1} parent=1 // pred_region
      %74 = dma.done [#allocation5], 2048
    $region37: #{model_forward.1} parent=1 // pred_fallthru
      _
    // Predicated region
    $region38: #{model_forward.1} parent=1 // pred_check
      _
    $region39: #{model_forward.1} parent=1 // pred_check_branch
      %76 = sbr.rel (0) target = $region41
    $region40: #{model_forward.1} parent=1 // pred_region
      %77 = dma.done [#allocation8], 3072
    $region41: #{model_forward.1} parent=1 // pred_fallthru
      _
    %v79 = vld [vmem:[%s5] sm:$0x3]
    %v80 = vld [vmem:[%s5 + $0x2] sm:$0x3]
    %v81 = vld [vmem:[%s5 + $0x4] sm:$0x3]
    %v82 = vld [vmem:[%s5 + $0x6] sm:$0x1]
    %v83 = vld [vmem:[%s5 + $0x7] sm:$0x1]
    %v84 = vld [vmem:[%s0] sm:$0xf]
    %v85 = vld [vmem:[%s0 + $0x4] sm:$0xf]
    %v86 = vld [vmem:[#allocation2] sm:$0xff]
    %v87 = vld [vmem:[#allocation2 + $0x8] sm:$0xff]
    %v88 = vld [vmem:[#allocation2 + $0x10] sm:$0xff]
    %v89 = vld [vmem:[#allocation2 + $0x18] sm:$0xff]
    %v91 = vlaneseq
    %v92 = vshrl.u32 %v91, 7
    %v93 = vsub.s32 0, %v92
    %v94 = vrot.slane %v79, %v93
    %v95 = vlaneseq
    %v96 = vshrl.u32 %v95, 7
    %v97 = vsub.s32 1, %v96
    %v98 = vrot.slane %v79, %v97
    %v103 = vunpack.c.l.b16 %v84
    %v104 = vunpack.c.l.b16 %v85
    %v105 = vpack.c.b16 %v104, %v103
    %v110 = vunpack.c.l.b16 %v86
    %v111 = vunpack.c.h.b16 %v86
    %v112 = vunpack.c.l.b16 %v87
    %v113 = vunpack.c.h.b16 %v87
    %v114 = vunpack.c.l.b16 %v88
    %v115 = vunpack.c.h.b16 %v88
    %v116 = vunpack.c.l.b16 %v89
    %v117 = vunpack.c.h.b16 %v89
    %v118 = vpack.c.b16 %v112, %v110
    %v119 = vpack.c.b16 %v113, %v111
    %v120 = vpack.c.b16 %v116, %v114
    %v121 = vpack.c.b16 %v117, %v115
    %vm126 = vcmask 261120
    %v128 = vsel %vm126, %v105, 0
    %130 = vmatprep.subr.bf16.mxu0 0
    %131 = vmatpush1.bf16.msra.mxu0 0
    %132 = vmatprep.subr.bf16.mxu0 0
    %133 = vmatpush1.bf16.msra.mxu0 0
    %134 = vmatprep.subr.bf16.mxu0 0
    %135 = vmatpush1.bf16.msra.mxu0 0
    %136 = vmatprep.subr.bf16.mxu0 0
    %137 = vmatpush1.bf16.msra.mxu0 0
    %138 = vmatprep.subr.bf16.mxu0 0
    %139 = vmatpush1.bf16.msra.mxu0 0
    %140 = vmatprep.subr.bf16.mxu0 0
    %141 = vmatpush1.bf16.msra.mxu0 0
    %142 = vmatprep.subr.bf16.mxu0 %v121
    %143 = vmatpush1.bf16.msra.mxu0 %v120
    %144 = vmatprep.subr.bf16.mxu0 %v119
    %145 = vmatpush1.bf16.msra.mxu0 %v118
    %146 = vmatprep.subr.bf16.mxu0 0
    %147 = vmatpush2.bf16.msra.mxu0 0
    %148 = vmatprep.subr.bf16.mxu0 0
    %149 = vmatpush2.bf16.msra.mxu0 0
    %150 = vmatprep.subr.bf16.mxu0 0
    %151 = vmatpush2.bf16.msra.mxu0 0
    %152 = vmatprep.subr.bf16.mxu0 0
    %153 = vmatpush2.bf16.msra.mxu0 0
    %154 = vmatprep.subr.bf16.mxu0 0
    %155 = vmatpush2.bf16.msra.mxu0 0
    %156 = vmatprep.subr.bf16.mxu0 0
    %157 = vmatpush2.bf16.msra.mxu0 0
    %158 = vmatprep.subr.bf16.mxu0 0
    %159 = vmatpush2.bf16.msra.mxu0 0
    %160 = vmatprep.subr.bf16.mxu0 0
    %161 = vmatpush2.bf16.msra.mxu0 0
    %162 = vmatprep.mubr.bf16.mxu0 0
    %163 = vmatmul.mubr.bf16.gmra.mxu0 %v128
    %v164 = vpop.f32.mrf.mxu0
    %v165 = vadd.f32 %v94, %v164
    %v166 = vpop.f32.mrf.mxu0
    %v167 = vadd.f32 %v98, %v166
    %v168 = vpop.f32.mrf.mxu0
    %v169 = vadd.f32 %v94, %v168
    %v170 = vpop.f32.mrf.mxu0
    %v171 = vadd.f32 %v98, %v170
    %172 = vdwg.mxu0
    %v173 = vmax.f32 %v165, 0.0
    %v174 = vmax.f32 %v167, 0.0
    %v175 = vmax.f32 %v169, 0.0
    %v176 = vmax.f32 %v171, 0.0
    %v177 = vld [vmem:[#allocation4] sm:$0xff]
    %v178 = vld [vmem:[#allocation4 + $0x8] sm:$0xff]
    %v179 = vld [vmem:[#allocation4 + $0x10] sm:$0xff]
    %v180 = vld [vmem:[#allocation4 + $0x18] sm:$0xff]
    %v181 = vld [vmem:[#allocation4 + $0x20] sm:$0xff]
    %v182 = vld [vmem:[#allocation4 + $0x28] sm:$0xff]
    %v183 = vld [vmem:[#allocation4 + $0x30] sm:$0xff]
    %v184 = vld [vmem:[#allocation4 + $0x38] sm:$0xff]
    %v185 = vld [vmem:[#allocation4 + $0x40] sm:$0xff]
    %v186 = vld [vmem:[#allocation4 + $0x48] sm:$0xff]
    %v187 = vld [vmem:[#allocation4 + $0x50] sm:$0xff]
    %v188 = vld [vmem:[#allocation4 + $0x58] sm:$0xff]
    %v189 = vld [vmem:[#allocation4 + $0x60] sm:$0xff]
    %v190 = vld [vmem:[#allocation4 + $0x68] sm:$0xff]
    %v191 = vld [vmem:[#allocation4 + $0x70] sm:$0xff]
    %v192 = vld [vmem:[#allocation4 + $0x78] sm:$0xff]
    %v193 = vld [vmem:[#allocation4 + $0x80] sm:$0xff]
    %v194 = vld [vmem:[#allocation4 + $0x88] sm:$0xff]
    %v195 = vld [vmem:[#allocation4 + $0x90] sm:$0xff]
    %v196 = vld [vmem:[#allocation4 + $0x98] sm:$0xff]
    %v197 = vld [vmem:[#allocation4 + $0xa0] sm:$0xff]
    %v198 = vld [vmem:[#allocation4 + $0xa8] sm:$0xff]
    %v199 = vld [vmem:[#allocation4 + $0xb0] sm:$0xff]
    %v200 = vld [vmem:[#allocation4 + $0xb8] sm:$0xff]
    %v201 = vld [vmem:[#allocation4 + $0xc0] sm:$0xff]
    %v202 = vld [vmem:[#allocation4 + $0xc8] sm:$0xff]
    %v203 = vld [vmem:[#allocation4 + $0xd0] sm:$0xff]
    %v204 = vld [vmem:[#allocation4 + $0xd8] sm:$0xff]
    %v205 = vld [vmem:[#allocation4 + $0xe0] sm:$0xff]
    %v206 = vld [vmem:[#allocation4 + $0xe8] sm:$0xff]
    %v207 = vld [vmem:[#allocation4 + $0xf0] sm:$0xff]
    %v208 = vld [vmem:[#allocation4 + $0xf8] sm:$0xff]
    %v209 = vpack.c.bf16 %v175, %v173
    %v210 = vpack.c.bf16 %v176, %v174
    %v212 = vlaneseq
    %v213 = vshrl.u32 %v212, 7
    %v214 = vsub.s32 0, %v213
    %v215 = vrot.slane %v80, %v214
    %v216 = vlaneseq
    %v217 = vshrl.u32 %v216, 7
    %v218 = vsub.s32 1, %v217
    %v219 = vrot.slane %v80, %v218
    %v254 = vunpack.c.l.b16 %v177
    %v255 = vunpack.c.h.b16 %v177
    %v256 = vunpack.c.l.b16 %v178
    %v257 = vunpack.c.h.b16 %v178
    %v258 = vunpack.c.l.b16 %v179
    %v259 = vunpack.c.h.b16 %v179
    %v260 = vunpack.c.l.b16 %v180
    %v261 = vunpack.c.h.b16 %v180
    %v262 = vunpack.c.l.b16 %v181
    %v263 = vunpack.c.h.b16 %v181
    %v264 = vunpack.c.l.b16 %v182
    %v265 = vunpack.c.h.b16 %v182
    %v266 = vunpack.c.l.b16 %v183
    %v267 = vunpack.c.h.b16 %v183
    %v268 = vunpack.c.l.b16 %v184
    %v269 = vunpack.c.h.b16 %v184
    %v270 = vunpack.c.l.b16 %v185
    %v271 = vunpack.c.h.b16 %v185
    %v272 = vunpack.c.l.b16 %v186
    %v273 = vunpack.c.h.b16 %v186
    %v274 = vunpack.c.l.b16 %v187
    %v275 = vunpack.c.h.b16 %v187
    %v276 = vunpack.c.l.b16 %v188
    %v277 = vunpack.c.h.b16 %v188
    %v278 = vunpack.c.l.b16 %v189
    %v279 = vunpack.c.h.b16 %v189
    %v280 = vunpack.c.l.b16 %v190
    %v281 = vunpack.c.h.b16 %v190
    %v282 = vunpack.c.l.b16 %v191
    %v283 = vunpack.c.h.b16 %v191
    %v284 = vunpack.c.l.b16 %v192
    %v285 = vunpack.c.h.b16 %v192
    %v286 = vunpack.c.l.b16 %v193
    %v287 = vunpack.c.h.b16 %v193
    %v288 = vunpack.c.l.b16 %v194
    %v289 = vunpack.c.h.b16 %v194
    %v290 = vunpack.c.l.b16 %v195
    %v291 = vunpack.c.h.b16 %v195
    %v292 = vunpack.c.l.b16 %v196
    %v293 = vunpack.c.h.b16 %v196
    %v294 = vunpack.c.l.b16 %v197
    %v295 = vunpack.c.h.b16 %v197
    %v296 = vunpack.c.l.b16 %v198
    %v297 = vunpack.c.h.b16 %v198
    %v298 = vunpack.c.l.b16 %v199
    %v299 = vunpack.c.h.b16 %v199
    %v300 = vunpack.c.l.b16 %v200
    %v301 = vunpack.c.h.b16 %v200
    %v302 = vunpack.c.l.b16 %v201
    %v303 = vunpack.c.h.b16 %v201
    %v304 = vunpack.c.l.b16 %v202
    %v305 = vunpack.c.h.b16 %v202
    %v306 = vunpack.c.l.b16 %v203
    %v307 = vunpack.c.h.b16 %v203
    %v308 = vunpack.c.l.b16 %v204
    %v309 = vunpack.c.h.b16 %v204
    %v310 = vunpack.c.l.b16 %v205
    %v311 = vunpack.c.h.b16 %v205
    %v312 = vunpack.c.l.b16 %v206
    %v313 = vunpack.c.h.b16 %v206
    %v314 = vunpack.c.l.b16 %v207
    %v315 = vunpack.c.h.b16 %v207
    %v316 = vunpack.c.l.b16 %v208
    %v317 = vunpack.c.h.b16 %v208
    %v318 = vpack.c.b16 %v256, %v254
    %v319 = vpack.c.b16 %v257, %v255
    %v320 = vpack.c.b16 %v260, %v258
    %v321 = vpack.c.b16 %v261, %v259
    %v322 = vpack.c.b16 %v264, %v262
    %v323 = vpack.c.b16 %v265, %v263
    %v324 = vpack.c.b16 %v268, %v266
    %v325 = vpack.c.b16 %v269, %v267
    %v326 = vpack.c.b16 %v272, %v270
    %v327 = vpack.c.b16 %v273, %v271
    %v328 = vpack.c.b16 %v276, %v274
    %v329 = vpack.c.b16 %v277, %v275
    %v330 = vpack.c.b16 %v280, %v278
    %v331 = vpack.c.b16 %v281, %v279
    %v332 = vpack.c.b16 %v284, %v282
    %v333 = vpack.c.b16 %v285, %v283
    %v334 = vpack.c.b16 %v288, %v286
    %v335 = vpack.c.b16 %v289, %v287
    %v336 = vpack.c.b16 %v292, %v290
    %v337 = vpack.c.b16 %v293, %v291
    %v338 = vpack.c.b16 %v296, %v294
    %v339 = vpack.c.b16 %v297, %v295
    %v340 = vpack.c.b16 %v300, %v298
    %v341 = vpack.c.b16 %v301, %v299
    %v342 = vpack.c.b16 %v304, %v302
    %v343 = vpack.c.b16 %v305, %v303
    %v344 = vpack.c.b16 %v308, %v306
    %v345 = vpack.c.b16 %v309, %v307
    %v346 = vpack.c.b16 %v312, %v310
    %v347 = vpack.c.b16 %v313, %v311
    %v348 = vpack.c.b16 %v316, %v314
    %v349 = vpack.c.b16 %v317, %v315
    %382 = vmatprep.subr.bf16.mxu0 %v333
    %383 = vmatpush1.bf16.msra.mxu0 %v332
    %384 = vmatprep.subr.bf16.mxu0 %v331
    %385 = vmatpush1.bf16.msra.mxu0 %v330
    %386 = vmatprep.subr.bf16.mxu0 %v329
    %387 = vmatpush1.bf16.msra.mxu0 %v328
    %388 = vmatprep.subr.bf16.mxu0 %v327
    %389 = vmatpush1.bf16.msra.mxu0 %v326
    %390 = vmatprep.subr.bf16.mxu0 %v325
    %391 = vmatpush1.bf16.msra.mxu0 %v324
    %392 = vmatprep.subr.bf16.mxu0 %v323
    %393 = vmatpush1.bf16.msra.mxu0 %v322
    %394 = vmatprep.subr.bf16.mxu0 %v321
    %395 = vmatpush1.bf16.msra.mxu0 %v320
    %396 = vmatprep.subr.bf16.mxu0 %v319
    %397 = vmatpush1.bf16.msra.mxu0 %v318
    %398 = vmatprep.subr.bf16.mxu0 %v349
    %399 = vmatpush2.bf16.msra.mxu0 %v348
    %400 = vmatprep.subr.bf16.mxu0 %v347
    %401 = vmatpush2.bf16.msra.mxu0 %v346
    %402 = vmatprep.subr.bf16.mxu0 %v345
    %403 = vmatpush2.bf16.msra.mxu0 %v344
    %404 = vmatprep.subr.bf16.mxu0 %v343
    %405 = vmatpush2.bf16.msra.mxu0 %v342
    %406 = vmatprep.subr.bf16.mxu0 %v341
    %407 = vmatpush2.bf16.msra.mxu0 %v340
    %408 = vmatprep.subr.bf16.mxu0 %v339
    %409 = vmatpush2.bf16.msra.mxu0 %v338
    %410 = vmatprep.subr.bf16.mxu0 %v337
    %411 = vmatpush2.bf16.msra.mxu0 %v336
    %412 = vmatprep.subr.bf16.mxu0 %v335
    %413 = vmatpush2.bf16.msra.mxu0 %v334
    %414 = vmatprep.mubr.bf16.mxu0 %v210
    %415 = vmatmul.mubr.bf16.gmra.mxu0 %v209
    %v416 = vpop.f32.mrf.mxu0
    %v417 = vadd.f32 %v215, %v416
    %v418 = vpop.f32.mrf.mxu0
    %v419 = vadd.f32 %v219, %v418
    %v420 = vpop.f32.mrf.mxu0
    %v421 = vadd.f32 %v215, %v420
    %v422 = vpop.f32.mrf.mxu0
    %v423 = vadd.f32 %v219, %v422
    %424 = vdwg.mxu0
    %v425 = vmax.f32 %v417, 0.0
    %v426 = vmax.f32 %v419, 0.0
    %v427 = vmax.f32 %v421, 0.0
    %v428 = vmax.f32 %v423, 0.0
    %v429 = vld [vmem:[#allocation6] sm:$0xff]
    %v430 = vld [vmem:[#allocation6 + $0x8] sm:$0xff]
    %v431 = vld [vmem:[#allocation6 + $0x10] sm:$0xff]
    %v432 = vld [vmem:[#allocation6 + $0x18] sm:$0xff]
    %v433 = vld [vmem:[#allocation6 + $0x20] sm:$0xff]
    %v434 = vld [vmem:[#allocation6 + $0x28] sm:$0xff]
    %v435 = vld [vmem:[#allocation6 + $0x30] sm:$0xff]
    %v436 = vld [vmem:[#allocation6 + $0x38] sm:$0xff]
    %v437 = vld [vmem:[#allocation6 + $0x40] sm:$0xff]
    %v438 = vld [vmem:[#allocation6 + $0x48] sm:$0xff]
    %v439 = vld [vmem:[#allocation6 + $0x50] sm:$0xff]
    %v440 = vld [vmem:[#allocation6 + $0x58] sm:$0xff]
    %v441 = vld [vmem:[#allocation6 + $0x60] sm:$0xff]
    %v442 = vld [vmem:[#allocation6 + $0x68] sm:$0xff]
    %v443 = vld [vmem:[#allocation6 + $0x70] sm:$0xff]
    %v444 = vld [vmem:[#allocation6 + $0x78] sm:$0xff]
    %v445 = vpack.c.bf16 %v427, %v425
    %v447 = vlaneseq
    %v448 = vshrl.u32 %v447, 7
    %v449 = vsub.s32 0, %v448
    %v450 = vrot.slane %v81, %v449
    %v451 = vlaneseq
    %v452 = vshrl.u32 %v451, 7
    %v453 = vsub.s32 1, %v452
    %v454 = vrot.slane %v81, %v453
    %v473 = vunpack.c.l.b16 %v429
    %v474 = vunpack.c.h.b16 %v429
    %v475 = vunpack.c.l.b16 %v430
    %v476 = vunpack.c.h.b16 %v430
    %v477 = vunpack.c.l.b16 %v431
    %v478 = vunpack.c.h.b16 %v431
    %v479 = vunpack.c.l.b16 %v432
    %v480 = vunpack.c.h.b16 %v432
    %v481 = vunpack.c.l.b16 %v433
    %v482 = vunpack.c.h.b16 %v433
    %v483 = vunpack.c.l.b16 %v434
    %v484 = vunpack.c.h.b16 %v434
    %v485 = vunpack.c.l.b16 %v435
    %v486 = vunpack.c.h.b16 %v435
    %v487 = vunpack.c.l.b16 %v436
    %v488 = vunpack.c.h.b16 %v436
    %v489 = vunpack.c.l.b16 %v437
    %v490 = vunpack.c.h.b16 %v437
    %v491 = vunpack.c.l.b16 %v438
    %v492 = vunpack.c.h.b16 %v438
    %v493 = vunpack.c.l.b16 %v439
    %v494 = vunpack.c.h.b16 %v439
    %v495 = vunpack.c.l.b16 %v440
    %v496 = vunpack.c.h.b16 %v440
    %v497 = vunpack.c.l.b16 %v441
    %v498 = vunpack.c.h.b16 %v441
    %v499 = vunpack.c.l.b16 %v442
    %v500 = vunpack.c.h.b16 %v442
    %v501 = vunpack.c.l.b16 %v443
    %v502 = vunpack.c.h.b16 %v443
    %v503 = vunpack.c.l.b16 %v444
    %v504 = vunpack.c.h.b16 %v444
    %v505 = vpack.c.b16 %v475, %v473
    %v506 = vpack.c.b16 %v476, %v474
    %v507 = vpack.c.b16 %v479, %v477
    %v508 = vpack.c.b16 %v480, %v478
    %v509 = vpack.c.b16 %v483, %v481
    %v510 = vpack.c.b16 %v484, %v482
    %v511 = vpack.c.b16 %v487, %v485
    %v512 = vpack.c.b16 %v488, %v486
    %v513 = vpack.c.b16 %v491, %v489
    %v514 = vpack.c.b16 %v492, %v490
    %v515 = vpack.c.b16 %v495, %v493
    %v516 = vpack.c.b16 %v496, %v494
    %v517 = vpack.c.b16 %v499, %v497
    %v518 = vpack.c.b16 %v500, %v498
    %v519 = vpack.c.b16 %v503, %v501
    %v520 = vpack.c.b16 %v504, %v502
    %537 = vmatprep.subr.bf16.mxu0 %v520
    %538 = vmatpush1.bf16.msra.mxu0 %v519
    %539 = vmatprep.subr.bf16.mxu0 %v518
    %540 = vmatpush1.bf16.msra.mxu0 %v517
    %541 = vmatprep.subr.bf16.mxu0 %v516
    %542 = vmatpush1.bf16.msra.mxu0 %v515
    %543 = vmatprep.subr.bf16.mxu0 %v514
    %544 = vmatpush1.bf16.msra.mxu0 %v513
    %545 = vmatprep.subr.bf16.mxu0 %v512
    %546 = vmatpush1.bf16.msra.mxu0 %v511
    %547 = vmatprep.subr.bf16.mxu0 %v510
    %548 = vmatpush1.bf16.msra.mxu0 %v509
    %549 = vmatprep.subr.bf16.mxu0 %v508
    %550 = vmatpush1.bf16.msra.mxu0 %v507
    %551 = vmatprep.subr.bf16.mxu0 %v506
    %552 = vmatpush1.bf16.msra.mxu0 %v505
    %553 = vmatprep.subr.bf16.mxu0 0
    %554 = vmatpush2.bf16.msra.mxu0 0
    %555 = vmatprep.subr.bf16.mxu0 0
    %556 = vmatpush2.bf16.msra.mxu0 0
    %557 = vmatprep.subr.bf16.mxu0 0
    %558 = vmatpush2.bf16.msra.mxu0 0
    %559 = vmatprep.subr.bf16.mxu0 0
    %560 = vmatpush2.bf16.msra.mxu0 0
    %561 = vmatprep.subr.bf16.mxu0 0
    %562 = vmatpush2.bf16.msra.mxu0 0
    %563 = vmatprep.subr.bf16.mxu0 0
    %564 = vmatpush2.bf16.msra.mxu0 0
    %565 = vmatprep.subr.bf16.mxu0 0
    %566 = vmatpush2.bf16.msra.mxu0 0
    %567 = vmatprep.subr.bf16.mxu0 0
    %568 = vmatpush2.bf16.msra.mxu0 0
    %569 = vmatprep.mubr.bf16.mxu0 0
    %570 = vmatmul.mubr.bf16.gmra.mxu0 %v445
    %v571 = vpop.f32.mrf.mxu0
    %v572 = vadd.f32 %v450, %v571
    %v573 = vpop.f32.mrf.mxu0
    %v574 = vadd.f32 %v454, %v573
    %v575 = vpop.f32.mrf.mxu0
    %v576 = vadd.f32 %v450, %v575
    %v577 = vpop.f32.mrf.mxu0
    %v578 = vadd.f32 %v454, %v577
    %579 = vdwg.mxu0
    %v580 = vmax.f32 %v572, 0.0
    %v581 = vmax.f32 %v574, 0.0
    %v582 = vmax.f32 %v576, 0.0
    %v583 = vmax.f32 %v578, 0.0
    %v584 = vld [vmem:[#allocation7] sm:$0xf]
    %v585 = vld [vmem:[#allocation7 + $0x4] sm:$0xf]
    %v586 = vld [vmem:[#allocation7 + $0x8] sm:$0xf]
    %v587 = vld [vmem:[#allocation7 + $0xc] sm:$0xf]
    %v588 = vld [vmem:[#allocation7 + $0x10] sm:$0xf]
    %v589 = vld [vmem:[#allocation7 + $0x14] sm:$0xf]
    %v590 = vld [vmem:[#allocation7 + $0x18] sm:$0xf]
    %v591 = vld [vmem:[#allocation7 + $0x1c] sm:$0xf]
    %v592 = vld [vmem:[#allocation7 + $0x20] sm:$0xf]
    %v593 = vld [vmem:[#allocation7 + $0x24] sm:$0xf]
    %v594 = vld [vmem:[#allocation7 + $0x28] sm:$0xf]
    %v595 = vld [vmem:[#allocation7 + $0x2c] sm:$0xf]
    %v596 = vld [vmem:[#allocation7 + $0x30] sm:$0xf]
    %v597 = vld [vmem:[#allocation7 + $0x34] sm:$0xf]
    %v598 = vld [vmem:[#allocation7 + $0x38] sm:$0xf]
    %v599 = vld [vmem:[#allocation7 + $0x3c] sm:$0xf]
    %v600 = vld [vmem:[#allocation7 + $0x40] sm:$0xf]
    %v601 = vld [vmem:[#allocation7 + $0x44] sm:$0xf]
    %v602 = vld [vmem:[#allocation7 + $0x48] sm:$0xf]
    %v603 = vld [vmem:[#allocation7 + $0x4c] sm:$0xf]
    %v604 = vld [vmem:[#allocation7 + $0x50] sm:$0xf]
    %v605 = vld [vmem:[#allocation7 + $0x54] sm:$0xf]
    %v606 = vld [vmem:[#allocation7 + $0x58] sm:$0xf]
    %v607 = vld [vmem:[#allocation7 + $0x5c] sm:$0xf]
    %v608 = vld [vmem:[#allocation7 + $0x60] sm:$0xf]
    %v609 = vld [vmem:[#allocation7 + $0x64] sm:$0xf]
    %v610 = vld [vmem:[#allocation7 + $0x68] sm:$0xf]
    %v611 = vld [vmem:[#allocation7 + $0x6c] sm:$0xf]
    %v612 = vld [vmem:[#allocation7 + $0x70] sm:$0xf]
    %v613 = vld [vmem:[#allocation7 + $0x74] sm:$0xf]
    %v614 = vld [vmem:[#allocation7 + $0x78] sm:$0xf]
    %v615 = vld [vmem:[#allocation7 + $0x7c] sm:$0xf]
    %v616 = vpack.c.bf16 %v582, %v580
    %v617 = vpack.c.bf16 %v583, %v581
    %v618 = vld [vmem:[#allocation7 + $0x80] sm:$0xf]
    %v619 = vld [vmem:[#allocation7 + $0x84] sm:$0xf]
    %v620 = vld [vmem:[#allocation7 + $0x88] sm:$0xf]
    %v621 = vld [vmem:[#allocation7 + $0x8c] sm:$0xf]
    %v622 = vld [vmem:[#allocation7 + $0x90] sm:$0xf]
    %v623 = vld [vmem:[#allocation7 + $0x94] sm:$0xf]
    %v624 = vld [vmem:[#allocation7 + $0x98] sm:$0xf]
    %v625 = vld [vmem:[#allocation7 + $0x9c] sm:$0xf]
    %v626 = vld [vmem:[#allocation7 + $0xa0] sm:$0xf]
    %v627 = vld [vmem:[#allocation7 + $0xa4] sm:$0xf]
    %v628 = vld [vmem:[#allocation7 + $0xa8] sm:$0xf]
    %v629 = vld [vmem:[#allocation7 + $0xac] sm:$0xf]
    %v630 = vld [vmem:[#allocation7 + $0xb0] sm:$0xf]
    %v631 = vld [vmem:[#allocation7 + $0xb4] sm:$0xf]
    %v632 = vld [vmem:[#allocation7 + $0xb8] sm:$0xf]
    %v633 = vld [vmem:[#allocation7 + $0xbc] sm:$0xf]
    %v634 = vpack.c.bf16 %v428, %v426
    %v651 = vunpack.c.l.b16 %v618
    %v652 = vunpack.c.l.b16 %v619
    %v653 = vunpack.c.l.b16 %v620
    %v654 = vunpack.c.l.b16 %v621
    %v655 = vunpack.c.l.b16 %v622
    %v656 = vunpack.c.l.b16 %v623
    %v657 = vunpack.c.l.b16 %v624
    %v658 = vunpack.c.l.b16 %v625
    %v659 = vunpack.c.l.b16 %v626
    %v660 = vunpack.c.l.b16 %v627
    %v661 = vunpack.c.l.b16 %v628
    %v662 = vunpack.c.l.b16 %v629
    %v663 = vunpack.c.l.b16 %v630
    %v664 = vunpack.c.l.b16 %v631
    %v665 = vunpack.c.l.b16 %v632
    %v666 = vunpack.c.l.b16 %v633
    %v667 = vpack.c.b16 %v652, %v651
    %v668 = vpack.c.b16 %v654, %v653
    %v669 = vpack.c.b16 %v656, %v655
    %v670 = vpack.c.b16 %v658, %v657
    %v671 = vpack.c.b16 %v660, %v659
    %v672 = vpack.c.b16 %v662, %v661
    %v673 = vpack.c.b16 %v664, %v663
    %v674 = vpack.c.b16 %v666, %v665
    %683 = vmatprep.subr.bf16.mxu0 0
    %684 = vmatpush1.bf16.msra.mxu0 %v674
    %685 = vmatprep.subr.bf16.mxu0 0
    %686 = vmatpush1.bf16.msra.mxu0 %v673
    %687 = vmatprep.subr.bf16.mxu0 0
    %688 = vmatpush1.bf16.msra.mxu0 %v672
    %689 = vmatprep.subr.bf16.mxu0 0
    %690 = vmatpush1.bf16.msra.mxu0 %v671
    %691 = vmatprep.subr.bf16.mxu0 0
    %692 = vmatpush1.bf16.msra.mxu0 %v670
    %693 = vmatprep.subr.bf16.mxu0 0
    %694 = vmatpush1.bf16.msra.mxu0 %v669
    %695 = vmatprep.subr.bf16.mxu0 0
    %696 = vmatpush1.bf16.msra.mxu0 %v668
    %697 = vmatprep.subr.bf16.mxu0 0
    %698 = vmatpush1.bf16.msra.mxu0 %v667
    %699 = vmatprep.subr.bf16.mxu0 0
    %700 = vmatpush2.bf16.msra.mxu0 0
    %701 = vmatprep.subr.bf16.mxu0 0
    %702 = vmatpush2.bf16.msra.mxu0 0
    %703 = vmatprep.subr.bf16.mxu0 0
    %704 = vmatpush2.bf16.msra.mxu0 0
    %705 = vmatprep.subr.bf16.mxu0 0
    %706 = vmatpush2.bf16.msra.mxu0 0
    %707 = vmatprep.subr.bf16.mxu0 0
    %708 = vmatpush2.bf16.msra.mxu0 0
    %709 = vmatprep.subr.bf16.mxu0 0
    %710 = vmatpush2.bf16.msra.mxu0 0
    %711 = vmatprep.subr.bf16.mxu0 0
    %712 = vmatpush2.bf16.msra.mxu0 0
    %713 = vmatprep.subr.bf16.mxu0 0
    %714 = vmatpush2.bf16.msra.mxu0 0
    %715 = vmatprep.mubr.bf16.mxu0 0
    %716 = vmatmul.mubr.bf16.gmra.mxu0 %v634
    %v717 = vpop.f32.mrf.mxu0
    %v718 = vadd.f32 0.0, %v717
    %v719 = vpop.f32.mrf.mxu0
    %v720 = vpop.f32.mrf.mxu0
    %v721 = vadd.f32 0.0, %v720
    %v722 = vpop.f32.mrf.mxu0
    %723 = vdwg.mxu0
    %v756 = vunpack.c.l.b16 %v584
    %v757 = vunpack.c.l.b16 %v585
    %v758 = vunpack.c.l.b16 %v586
    %v759 = vunpack.c.l.b16 %v587
    %v760 = vunpack.c.l.b16 %v588
    %v761 = vunpack.c.l.b16 %v589
    %v762 = vunpack.c.l.b16 %v590
    %v763 = vunpack.c.l.b16 %v591
    %v764 = vunpack.c.l.b16 %v592
    %v765 = vunpack.c.l.b16 %v593
    %v766 = vunpack.c.l.b16 %v594
    %v767 = vunpack.c.l.b16 %v595
    %v768 = vunpack.c.l.b16 %v596
    %v769 = vunpack.c.l.b16 %v597
    %v770 = vunpack.c.l.b16 %v598
    %v771 = vunpack.c.l.b16 %v599
    %v772 = vunpack.c.l.b16 %v600
    %v773 = vunpack.c.l.b16 %v601
    %v774 = vunpack.c.l.b16 %v602
    %v775 = vunpack.c.l.b16 %v603
    %v776 = vunpack.c.l.b16 %v604
    %v777 = vunpack.c.l.b16 %v605
    %v778 = vunpack.c.l.b16 %v606
    %v779 = vunpack.c.l.b16 %v607
    %v780 = vunpack.c.l.b16 %v608
    %v781 = vunpack.c.l.b16 %v609
    %v782 = vunpack.c.l.b16 %v610
    %v783 = vunpack.c.l.b16 %v611
    %v784 = vunpack.c.l.b16 %v612
    %v785 = vunpack.c.l.b16 %v613
    %v786 = vunpack.c.l.b16 %v614
    %v787 = vunpack.c.l.b16 %v615
    %v788 = vpack.c.b16 %v757, %v756
    %v789 = vpack.c.b16 %v759, %v758
    %v790 = vpack.c.b16 %v761, %v760
    %v791 = vpack.c.b16 %v763, %v762
    %v792 = vpack.c.b16 %v765, %v764
    %v793 = vpack.c.b16 %v767, %v766
    %v794 = vpack.c.b16 %v769, %v768
    %v795 = vpack.c.b16 %v771, %v770
    %v796 = vpack.c.b16 %v773, %v772
    %v797 = vpack.c.b16 %v775, %v774
    %v798 = vpack.c.b16 %v777, %v776
    %v799 = vpack.c.b16 %v779, %v778
    %v800 = vpack.c.b16 %v781, %v780
    %v801 = vpack.c.b16 %v783, %v782
    %v802 = vpack.c.b16 %v785, %v784
    %v803 = vpack.c.b16 %v787, %v786
    %820 = vmatprep.subr.bf16.mxu0 0
    %821 = vmatpush1.bf16.msra.mxu0 %v795
    %822 = vmatprep.subr.bf16.mxu0 0
    %823 = vmatpush1.bf16.msra.mxu0 %v794
    %824 = vmatprep.subr.bf16.mxu0 0
    %825 = vmatpush1.bf16.msra.mxu0 %v793
    %826 = vmatprep.subr.bf16.mxu0 0
    %827 = vmatpush1.bf16.msra.mxu0 %v792
    %828 = vmatprep.subr.bf16.mxu0 0
    %829 = vmatpush1.bf16.msra.mxu0 %v791
    %830 = vmatprep.subr.bf16.mxu0 0
    %831 = vmatpush1.bf16.msra.mxu0 %v790
    %832 = vmatprep.subr.bf16.mxu0 0
    %833 = vmatpush1.bf16.msra.mxu0 %v789
    %834 = vmatprep.subr.bf16.mxu0 0
    %835 = vmatpush1.bf16.msra.mxu0 %v788
    %836 = vmatprep.subr.bf16.mxu0 0
    %837 = vmatpush2.bf16.msra.mxu0 %v803
    %838 = vmatprep.subr.bf16.mxu0 0
    %839 = vmatpush2.bf16.msra.mxu0 %v802
    %840 = vmatprep.subr.bf16.mxu0 0
    %841 = vmatpush2.bf16.msra.mxu0 %v801
    %842 = vmatprep.subr.bf16.mxu0 0
    %843 = vmatpush2.bf16.msra.mxu0 %v800
    %844 = vmatprep.subr.bf16.mxu0 0
    %845 = vmatpush2.bf16.msra.mxu0 %v799
    %846 = vmatprep.subr.bf16.mxu0 0
    %847 = vmatpush2.bf16.msra.mxu0 %v798
    %848 = vmatprep.subr.bf16.mxu0 0
    %849 = vmatpush2.bf16.msra.mxu0 %v797
    %850 = vmatprep.subr.bf16.mxu0 0
    %851 = vmatpush2.bf16.msra.mxu0 %v796
    %852 = vmatprep.mubr.bf16.mxu0 %v617
    %853 = vmatmul.mubr.bf16.gmra.mxu0 %v616
    %v854 = vpop.f32.mrf.mxu0
    %v855 = vadd.f32 %v718, %v854
    %v856 = vpop.f32.mrf.mxu0
    %v857 = vpop.f32.mrf.mxu0
    %v858 = vadd.f32 %v721, %v857
    %v859 = vpop.f32.mrf.mxu0
    %860 = vdwg.mxu0
    %v862 = vlaneseq
    %v863 = vshrl.u32 %v862, 7
    %v864 = vsub.s32 0, %v863
    %v865 = vrot.slane %v82, %v864
    %v867 = vadd.f32 %v855, %v865
    %v868 = vadd.f32 %v858, %v865
    %vm869 = vcmp.gt.f32.partialorder %v83, 0.5
    %v870 = vxor.u32 %v867, 2147483648
    %v871 = vxor.u32 %v868, 2147483648
    %v872 = vmul.f32 %v870, 1.442695
    %v873 = vpow.pop %v872
    %v874 = vmul.f32 %v871, 1.442695
    %v875 = vpow.pop %v874
    %v876 = vadd.f32 %v873, 1.0
    %v877 = vadd.f32 %v875, 1.0
    %v878 = vrcp.pop %v876
    %v879 = vmul.f32 1.0, %v878
    %v880 = vrcp.pop %v877
    %v881 = vmul.f32 1.0, %v880
    %v882 = vsel %vm869, 1, 0
    %v883 = vlaneseq
    %v884 = vshrl.u32 %v883, 7
    %v885 = vsub.s32 0, %v884
    %v886 = vrot.slane %v882, %v885
    %vm887 = vcmp.eq.s32.totalorder %v886, 1
    %v888 = vsel %vm887, %v879, %v867
    %v889 = vsel %vm887, %v881, %v868
    %v890 = vpack.c.bf16 %v889, %v888
    %v892 = vunpack.c.l.b16 %v890
    %v893 = vunpack.c.h.b16 %v890
    %v894 = vpack.c.b16 %v892, %v892
    %v895 = vpack.c.b16 %v893, %v893
    %898 = vst [vmem:[%s6] sm:$0xf] %v894
    %899 = vst [vmem:[%s6 + $0x4] sm:$0xf] %v895
    // Predicated region
    $region42: #{model_forward.1} parent=1 // pred_check
      _
    $region43: #{model_forward.1} parent=1 // pred_check_branch
      %901 = sbr.rel (0) target = $region45
    $region44: #{model_forward.1} parent=1 // pred_region
      _
    $region45: #{model_forward.1} parent=1 // pred_fallthru
      _
    // Predicated region
    $region46: #{model_forward.1} parent=1 // pred_check
      _
    $region47: #{model_forward.1} parent=1 // pred_check_branch
      %903 = sbr.rel (0) target = $region49
    $region48: #{model_forward.1} parent=1 // pred_region
      _
    $region49: #{model_forward.1} parent=1 // pred_fallthru
      _
    %904 = vsyncpa [#allocation3], 1
    %905 = vsyncpa [#allocation5], 1
    %906 = vsyncpa [#allocation8], 1

</llo_original>
